<compile_context>
chip_gen: v7x
topology: tpu7x:2x2x1
jax: 0.10.0
libtpu: 0.0.40
codegen_flags: <defaults>
</compile_context>

<pallas_src>
import math

import jax
import jax.numpy as jnp
from jax.experimental import pallas as pl
from jax.experimental.pallas import tpu as pltpu


def _round_up(n, m):
    return ((n + m - 1) // m) * m


def _vmem_capacity_bytes():
    try:
        return int(pltpu.get_tpu_info().vmem_capacity_bytes)
    except Exception:
        return 64 * 1024 * 1024   # conservative default (v7x per-TC VMEM)


def mvg_forward_kernel(x_ref, w_ref, b_ref, o_ref):
    """Grid = (B-tiles, Dout-tiles, K-tiles); K is the last ("arbitrary") axis.

    The output block index is (i, j) for every k, so o_ref stays VMEM-resident
    across the reduction axis and doubles as the f32 accumulator (no scratch).
    """
    k = pl.program_id(2)

    @pl.when(k == 0)
    def _():
        # Initialize the accumulator with the bias row (last row of W, i.e. the
        # contribution of the implicit ones column).
        o_ref[...] = jnp.broadcast_to(b_ref[...], o_ref.shape)

    o_ref[...] += jnp.dot(x_ref[...], w_ref[...],
                          preferred_element_type=jnp.float32)


def _pick_tiles(B, Kp0, Np0, vmem_capacity):
    """Generation-aware tile selection. Kp0/Np0 are 128-rounded K / D_out."""
    big_vmem = vmem_capacity >= 96 * 1024 * 1024      # v5e/v6e (128 MiB) vs v7x (64 MiB)
    budget = vmem_capacity // 2                        # headroom for compiler scratch etc.

    tm = min(512 if big_vmem else 256, _round_up(B, 8))
    tn = min(512, Np0)
    tk = min(1024 if big_vmem else 512, Kp0)

    # Keep the fused weight fully VMEM-resident when small enough: with tk == Kp
    # and tn == Np its block index never changes, so it is DMA'd exactly once.
    if 2 * 4 * Kp0 * Np0 <= budget // 2:
        tk, tn = Kp0, Np0

    def working_set(tm_, tn_, tk_):
        # f32, everything counted as double-buffered (worst case).
        return 4 * 2 * (tm_ * tk_ + tk_ * tn_ + tm_ * tn_ + tn_)

    for _ in range(16):
        if working_set(tm, tn, tk) <= budget:
            break
        if tk > 128 and tk >= max(tm, tn):
            tk = max(128, _round_up(tk // 2, 128))
        elif tn > 128 and tn >= tm:
            tn = max(128, _round_up(tn // 2, 128))
        elif tm > 8:
            tm = max(8, _round_up(tm // 2, 8))
        else:
            break
    return tm, tn, tk


def mvg_layer_forward(x, posterior_W_m, posterior_W_u, posterior_W_v, eps,
                      *, force_pallas=False, tile_sizes=None):
    """x: [B, F], posterior_W_m/eps: [F+1, D_out], u: [F+1], v: [D_out].

    Returns [B, D_out] float32, matching the PyTorch forward (to fp tolerance).
    """
    B, F = x.shape
    d_in, d_out = posterior_W_m.shape
    assert d_in == F + 1
    assert eps.shape == (d_in, d_out)
    assert posterior_W_u.shape == (d_in,)
    assert posterior_W_v.shape == (d_out,)

    f32 = jnp.float32
    x = x.astype(f32)

    # Build the effective weight ONCE (single fused O(d_in*d_out) elementwise op):
    #   W = M + diag(exp(0.5*u)) @ eps @ diag(exp(0.5*v))
    eu = jnp.exp(0.5 * posterior_W_u.astype(f32))              # [F+1]
    ev = jnp.exp(0.5 * posterior_W_v.astype(f32))              # [D_out]
    W = posterior_W_m.astype(f32) + eu[:, None] * eps.astype(f32) * ev[None, :]
    W_main = W[:F]                                             # [F, D_out]
    bias = W[F]                                                # [D_out]

    # Small problems: padding + per-call overhead dominate; XLA's fused dot wins.
    if not force_pallas and (B < 128 or F < 256 or d_out < 128):
        return x @ W_main + bias[None, :]

    vmem_capacity = _vmem_capacity_bytes()
    Kp0 = _round_up(F, 128)
    Np0 = _round_up(d_out, 128)

    if tile_sizes is not None:
        tm, tn, tk = tile_sizes
        tm = min(_round_up(max(tm, 8), 8), _round_up(B, 8))
        tn = min(_round_up(max(tn, 128), 128), Np0)
        tk = min(_round_up(max(tk, 128), 128), Kp0)
    else:
        tm, tn, tk = _pick_tiles(B, Kp0, Np0, vmem_capacity)

    Kp = _round_up(F, tk)
    Np = _round_up(d_out, tn)

    # Pad only along K (needed for accumulation correctness) and the cheap
    # weight/bias along K/N.  The batch dim of x and of the output uses ragged
    # grid edges (masked stores), so the potentially-large x is never copied
    # along B in HBM.
    xp = x if Kp == F else jnp.pad(x, ((0, 0), (0, Kp - F)))
    Wp = W_main if (Kp == F and Np == d_out) else jnp.pad(
        W_main, ((0, Kp - F), (0, Np - d_out)))
    bp = (bias if Np == d_out else jnp.pad(bias, (0, Np - d_out))).reshape(1, Np)

    # Note: on v7x (2 TCs) megacore sharding needs (Bp/tm)*(Np/tn) >= 2 blocks;
    # small grids are routed to the XLA fallback above anyway.
    grid = (pl.cdiv(B, tm), Np // tn, Kp // tk)

    out_padded = pl.pallas_call(
        mvg_forward_kernel,
        out_shape=jax.ShapeDtypeStruct((B, Np), jnp.float32),
        grid_spec=pltpu.PrefetchScalarGridSpec(
            num_scalar_prefetch=0,
            grid=grid,
            in_specs=[
                pl.BlockSpec((tm, tk), lambda i, j, k: (i, k)),   # x
                pl.BlockSpec((tk, tn), lambda i, j, k: (k, j)),   # fused W (main rows)
                pl.BlockSpec((1, tn), lambda i, j, k: (0, j)),    # bias row
            ],
            out_specs=pl.BlockSpec((tm, tn), lambda i, j, k: (i, j)),
        ),
        compiler_params=pltpu.CompilerParams(
            dimension_semantics=("parallel", "parallel", "arbitrary"),
            vmem_limit_bytes=min(int(vmem_capacity * 3 // 4), 112 * 1024 * 1024),
        ),
    )(xp, Wp, bp)

    return out_padded if Np == d_out else out_padded[:, :d_out]


def mvg_layer_forward_ref(x, M, u, v, eps):
    """Pure-JAX reference (mirrors the torch forward exactly)."""
    B = x.shape[0]
    x_aug = jnp.concatenate([x, jnp.ones((B, 1), dtype=x.dtype)], axis=1)
    W = M + jnp.exp(0.5 * u)[:, None] * eps * jnp.exp(0.5 * v)[None, :]
    return x_aug @ W


if __name__ == "__main__":
    key = jax.random.PRNGKey(0)

    def make_params(k, input_size, output_size):
        d_in = input_size + 1
        k_m, k_eps = jax.random.split(k)
        # Mirrors reset_posterior(): M ~ N(0, 0.001), u = v = log(0.001).
        M = 0.001 * jax.random.normal(k_m, (d_in, output_size), dtype=jnp.float32)
        u = jnp.full((d_in,), math.log(0.001), dtype=jnp.float32)
        v = jnp.full((output_size,), math.log(0.001), dtype=jnp.float32)
        # Deterministic stand-in for torch.normal(0, 1, size=M.shape) at forward time.
        eps = jax.random.normal(k_eps, (d_in, output_size), dtype=jnp.float32)
        return M, u, v, eps

    def check(name, batch, input_size, output_size, k, **kw):
        k_x, k_p = jax.random.split(k)
        x = jax.random.normal(k_x, (batch, input_size), dtype=jnp.float32)
        M, u, v, eps = make_params(k_p, input_size, output_size)
        out = jax.block_until_ready(mvg_layer_forward(x, M, u, v, eps, **kw))
        ref = mvg_layer_forward_ref(x, M, u, v, eps)
        assert out.shape == (batch, output_size), (name, out.shape)
        err = float(jnp.max(jnp.abs(out - ref)))
        assert jnp.allclose(out, ref, atol=1e-4, rtol=1e-3), \
            f"{name}: max abs err {err}"

    k1, k2, k3 = jax.random.split(key, 3)
    # Tiny shapes matching the module defaults; force the Pallas path.
    check("small", batch=8, input_size=32, output_size=16, k=k1, force_pallas=True)
    # K/N padding + VMEM-resident weight, single grid block per axis.
    check("medium", batch=96, input_size=200, output_size=96, k=k2, force_pallas=True)
    # Multi-tile grid (2, 2, 4): exercises K-accumulation into o_ref and block reuse.
    check("tiled", batch=32, input_size=512, output_size=256, k=k3,
          force_pallas=True, tile_sizes=(16, 128, 128))

    print("KERNEL_OK")
</pallas_src>

<mosaic_0001>
module attributes {stable_mosaic.version = 11 : i64} {
  func.func @mvg_forward_kernel(%arg0: i32, %arg1: i32, %arg2: i32, %arg3: memref<8x128xf32, #tpu.memory_space<vmem>>, %arg4: memref<128x128xf32, #tpu.memory_space<vmem>>, %arg5: memref<1x128xf32, #tpu.memory_space<vmem>>, %arg6: memref<8x128xf32, #tpu.memory_space<vmem>>) attributes {dimension_semantics = [#tpu.dimension_semantics<parallel>, #tpu.dimension_semantics<parallel>, #tpu.dimension_semantics<arbitrary>], iteration_bounds = array<i64: 1, 1, 1>, scalar_prefetch = 0 : i64, scratch_operands = 0 : i64, tpu.core_type = #tpu.core_type<tc>, window_params = [{transform_indices = @transform_0, window_bounds = array<i64: 8, 128>}, {transform_indices = @transform_1, window_bounds = array<i64: 128, 128>}, {transform_indices = @transform_2, window_bounds = array<i64: 1, 128>}, {transform_indices = @transform_3, window_bounds = array<i64: 8, 128>}]} {
    %c0_i32 = arith.constant 0 : i32
    %0 = arith.cmpi eq, %arg2, %c0_i32 : i32
    %1 = arith.extui %0 : i1 to i32
    %c0_i32_0 = arith.constant 0 : i32
    %2 = arith.cmpi ne, %1, %c0_i32_0 : i32
    scf.if %2 {
      %c0_8 = arith.constant 0 : index
      %c0_9 = arith.constant 0 : index
      %9 = vector.load %arg5[%c0_8, %c0_9] : memref<1x128xf32, #tpu.memory_space<vmem>>, vector<1x128xf32>
      %10 = vector.shape_cast %9 : vector<1x128xf32> to vector<1x128xf32>
      %11 = vector.broadcast %10 : vector<1x128xf32> to vector<8x128xf32>
      %c0_10 = arith.constant 0 : index
      %c0_11 = arith.constant 0 : index
      %12 = vector.load %arg6[%c0_10, %c0_11] : memref<8x128xf32, #tpu.memory_space<vmem>>, vector<8x128xf32>
      tpu.vector_store %arg6[%c0_10, %c0_11], %11 {strides = array<i32>} : memref<8x128xf32, #tpu.memory_space<vmem>>, vector<8x128xf32>,
    } else {
    }
    %c0 = arith.constant 0 : index
    %c0_1 = arith.constant 0 : index
    %3 = vector.load %arg6[%c0, %c0_1] : memref<8x128xf32, #tpu.memory_space<vmem>>, vector<8x128xf32>
    %c0_2 = arith.constant 0 : index
    %c0_3 = arith.constant 0 : index
    %4 = vector.load %arg3[%c0_2, %c0_3] : memref<8x128xf32, #tpu.memory_space<vmem>>, vector<8x128xf32>
    %c0_4 = arith.constant 0 : index
    %c0_5 = arith.constant 0 : index
    %5 = vector.load %arg4[%c0_4, %c0_5] : memref<128x128xf32, #tpu.memory_space<vmem>>, vector<128x128xf32>
    %cst = arith.constant dense<0.000000e+00> : vector<8x128xf32>
    %6 = tpu.matmul %4, %5, %cst {dimension_numbers = #tpu.dot_dimension_numbers<[1], [0], [0], [1], [0, 0, 1, 1], [], []>} : vector<8x128xf32>, vector<128x128xf32>, vector<8x128xf32> -> vector<8x128xf32>
    %7 = arith.addf %3, %6 : vector<8x128xf32>
    %c0_6 = arith.constant 0 : index
    %c0_7 = arith.constant 0 : index
    %8 = vector.load %arg6[%c0_6, %c0_7] : memref<8x128xf32, #tpu.memory_space<vmem>>, vector<8x128xf32>
    tpu.vector_store %arg6[%c0_6, %c0_7], %7 {strides = array<i32>} : memref<8x128xf32, #tpu.memory_space<vmem>>, vector<8x128xf32>,
    return
  }
  func.func @transform_0(%arg0: i32, %arg1: i32, %arg2: i32) -> (i32, i32) {
    %c0_i32 = arith.constant 0 : i32
    return %arg0, %arg2 : i32, i32
  }
  func.func @transform_1(%arg0: i32, %arg1: i32, %arg2: i32) -> (i32, i32) {
    %c0_i32 = arith.constant 0 : i32
    return %arg2, %arg1 : i32, i32
  }
  func.func @transform_2(%arg0: i32, %arg1: i32, %arg2: i32) -> (i32, i32) {
    %c0_i32 = arith.constant 0 : i32
    %c0_i32_0 = arith.constant 0 : i32
    return %c0_i32, %arg1 : i32, i32
  }
  func.func @transform_3(%arg0: i32, %arg1: i32, %arg2: i32) -> (i32, i32) {
    %c0_i32 = arith.constant 0 : i32
    return %arg0, %arg1 : i32, i32
  }
}

</mosaic_0001>

<llo_original>
// kernel: tpu_custom_call.1
$region0: #{tpu_custom_call.1}
  #allocation0 [shape = 'u32[]', space=smem, size = 0x4, offset = 0x4, fixed_abs, tag = 'smem constant byte address 0x4 - core index']
  #allocation1 [shape = 'u32[144,128]{1,0:T(1,128)}', space=vmem, size = 0x12000, scoped, tag = 'internal scratch']
  %s0 = inlined_call_operand.hbm [shape: f32[8,128], index: 0, kind: input, shape index: {}]
  %s1 = inlined_call_operand.hbm [shape: f32[128,128], index: 1, kind: input, shape index: {}]
  %s2 = inlined_call_operand.vmem [shape: f32[1,128], index: 2, kind: input, shape index: {}]
  %s3 = inlined_call_operand.hbm [shape: f32[8,128], index: 3, kind: output, shape index: {}]
  %s4 = sld [smem:[#allocation0]]
  $region34: #{tpu_custom_call.1} parent=0
    _
  %s6 = ssub.s32 1, %s4
  %s7 = scalar_select 0, %s6, %s4
  $region1: #{tpu_custom_call.1} parent=0
    #allocation2 [shape = 'u8[4096]{0}', space=vmem, size = 0x1000, scoped, tag = 'input window, operand 0, single buffered']
    #allocation3 [shape = 's32[1]{0}', space=sflag, size = 0x4, scoped, tag = 'scoped memory for tpu_custom_call.1']
    #allocation4 [shape = 's32[1]{0}', space=sflag, size = 0x4, scoped, tag = 'scoped memory for tpu_custom_call.1']
    #allocation5 [shape = 'u8[65536]{0}', space=vmem, size = 0x10000, scoped, tag = 'input window, operand 1, single buffered']
    #allocation6 [shape = 's32[1]{0}', space=sflag, size = 0x4, scoped, tag = 'scoped memory for tpu_custom_call.1']
    #allocation7 [shape = 'u8[4096]{0}', space=vmem, size = 0x1000, scoped, tag = 'output window, operand 0, single buffered']
    %8 = vsyncpa [#allocation3], 0
    %9 = vsyncpa [#allocation6], 0
    %10 = vsyncpa [#allocation4], 0
    // Predicated region
    $region2: #{tpu_custom_call.1} parent=1 // pred_check
      _
    $region3: #{tpu_custom_call.1} parent=1 // pred_check_branch
      %12 = sbr.rel (0) target = $region5
    $region4: #{tpu_custom_call.1} parent=1 // pred_region
      %s14 = ssub.s32 128, 128
      %15 = vsyncadd [#allocation3], %s14
      %s17 = sshll.u32 [#allocation2], 4
      %s18 = int_to_ptr.vmem [resolvable:$true] %s17
      %20 = dma.hbm_to_vmem [thread:$0]  %s0, 128, %s18, [#allocation3]
    $region5: #{tpu_custom_call.1} parent=1 // pred_fallthru
      _
    // Predicated region
    $region6: #{tpu_custom_call.1} parent=1 // pred_check
      _
    $region7: #{tpu_custom_call.1} parent=1 // pred_check_branch
      %22 = sbr.rel (0) target = $region9
    $region8: #{tpu_custom_call.1} parent=1 // pred_region
      %s24 = ssub.s32 2048, 2048
      %25 = vsyncadd [#allocation6], %s24
      %s26 = sshll.u32 [#allocation5], 4
      %s27 = int_to_ptr.vmem [resolvable:$true] %s26
      %32 = dma.hbm_to_vmem [thread:$0]  %s1, 2048, %s27, [#allocation6], 128, 128, 8
    $region9: #{tpu_custom_call.1} parent=1 // pred_fallthru
      _
    // Predicated region
    $region10: #{tpu_custom_call.1} parent=1 // pred_check
      _
    $region11: #{tpu_custom_call.1} parent=1 // pred_check_branch
      %34 = sbr.rel (0) target = $region13
    $region12: #{tpu_custom_call.1} parent=1 // pred_region
      _
    $region13: #{tpu_custom_call.1} parent=1 // pred_fallthru
      _
    // Predicated region
    $region14: #{tpu_custom_call.1} parent=1 // pred_check
      _
    $region15: #{tpu_custom_call.1} parent=1 // pred_check_branch
      %36 = sbr.rel (0) target = $region17
    $region16: #{tpu_custom_call.1} parent=1 // pred_region
      %37 = dma.done [#allocation3], 128
    $region17: #{tpu_custom_call.1} parent=1 // pred_fallthru
      _
    // Predicated region
    $region18: #{tpu_custom_call.1} parent=1 // pred_check
      _
    $region19: #{tpu_custom_call.1} parent=1 // pred_check_branch
      %39 = sbr.rel (0) target = $region21
    $region20: #{tpu_custom_call.1} parent=1 // pred_region
      %40 = dma.done [#allocation6], 2048
    $region21: #{tpu_custom_call.1} parent=1 // pred_fallthru
      _
    %p41 = scmp.eq.s32.totalorder 0, 0
    // Predicated region
    $region22: #{tpu_custom_call.1} parent=1 // pred_check
      %p42 = pneg %p41
    $region23: #{tpu_custom_call.1} parent=1 // pred_check_branch
      %44 = sbr.rel (%p42) target = $region25
    $region24: #{tpu_custom_call.1} parent=1 // pred_region
      %v45 = vld [vmem:[%s2] sm:$0x1]
      %v47 = vlaneseq
      %v48 = vshrl.u32 %v47, 7
      %v49 = vsub.s32 0, %v48
      %v50 = vrot.slane %v45, %v49
      %52 = vst [vmem:[#allocation7] sm:$0xff] %v50
    $region25: #{tpu_custom_call.1} parent=1 // pred_fallthru
      _
    %v53 = vld [vmem:[#allocation7] sm:$0xff]
    %v54 = vld [vmem:[#allocation2] sm:$0xff]
    %v55 = vld [vmem:[#allocation5] sm:$0xff]
    %v56 = vld [vmem:[#allocation5 + $0x8] sm:$0xff]
    %v57 = vld [vmem:[#allocation5 + $0x10] sm:$0xff]
    %v58 = vld [vmem:[#allocation5 + $0x18] sm:$0xff]
    %v59 = vld [vmem:[#allocation5 + $0x20] sm:$0xff]
    %v60 = vld [vmem:[#allocation5 + $0x28] sm:$0xff]
    %v61 = vld [vmem:[#allocation5 + $0x30] sm:$0xff]
    %v62 = vld [vmem:[#allocation5 + $0x38] sm:$0xff]
    %v63 = vld [vmem:[#allocation5 + $0x40] sm:$0xff]
    %v64 = vld [vmem:[#allocation5 + $0x48] sm:$0xff]
    %v65 = vld [vmem:[#allocation5 + $0x50] sm:$0xff]
    %v66 = vld [vmem:[#allocation5 + $0x58] sm:$0xff]
    %v67 = vld [vmem:[#allocation5 + $0x60] sm:$0xff]
    %v68 = vld [vmem:[#allocation5 + $0x68] sm:$0xff]
    %v69 = vld [vmem:[#allocation5 + $0x70] sm:$0xff]
    %v70 = vld [vmem:[#allocation5 + $0x78] sm:$0xff]
    %71 = vmatprep.subr.mxu0 0.0
    %72 = vmatpush1.msra.mxu0 %v55
    %73 = vmatprep.subr.mxu0 0.0
    %74 = vmatpush1.msra.mxu0 %v56
    %75 = vmatprep.subr.mxu0 0.0
    %76 = vmatpush1.msra.mxu0 %v57
    %77 = vmatprep.subr.mxu0 0.0
    %78 = vmatpush1.msra.mxu0 %v58
    %79 = vmatprep.subr.mxu0 0.0
    %80 = vmatpush1.msra.mxu0 %v59
    %81 = vmatprep.subr.mxu0 0.0
    %82 = vmatpush1.msra.mxu0 %v60
    %83 = vmatprep.subr.mxu0 0.0
    %84 = vmatpush1.msra.mxu0 %v61
    %85 = vmatprep.subr.mxu0 0.0
    %86 = vmatpush1.msra.mxu0 %v62
    %87 = vmatprep.subr.mxu0 0.0
    %88 = vmatpush1.msra.mxu0 %v63
    %89 = vmatprep.subr.mxu0 0.0
    %90 = vmatpush1.msra.mxu0 %v64
    %91 = vmatprep.subr.mxu0 0.0
    %92 = vmatpush1.msra.mxu0 %v65
    %93 = vmatprep.subr.mxu0 0.0
    %94 = vmatpush1.msra.mxu0 %v66
    %95 = vmatprep.subr.mxu0 0.0
    %96 = vmatpush1.msra.mxu0 %v67
    %97 = vmatprep.subr.mxu0 0.0
    %98 = vmatpush1.msra.mxu0 %v68
    %99 = vmatprep.subr.mxu0 0.0
    %100 = vmatpush1.msra.mxu0 %v69
    %101 = vmatprep.subr.mxu0 0.0
    %102 = vmatpush1.msra.mxu0 %v70
    %103 = vmatprep.subr.mxu0 0.0
    %104 = vmatpush1.msra.mxu0 0.0
    %105 = vmatprep.subr.mxu0 0.0
    %106 = vmatpush1.msra.mxu0 0.0
    %107 = vmatprep.subr.mxu0 0.0
    %108 = vmatpush1.msra.mxu0 0.0
    %109 = vmatprep.subr.mxu0 0.0
    %110 = vmatpush1.msra.mxu0 0.0
    %111 = vmatprep.subr.mxu0 0.0
    %112 = vmatpush1.msra.mxu0 0.0
    %113 = vmatprep.subr.mxu0 0.0
    %114 = vmatpush1.msra.mxu0 0.0
    %115 = vmatprep.subr.mxu0 0.0
    %116 = vmatpush1.msra.mxu0 0.0
    %117 = vmatprep.subr.mxu0 0.0
    %118 = vmatpush1.msra.mxu0 0.0
    %119 = vmatprep.subr.mxu0 0.0
    %120 = vmatpush1.msra.mxu0 0.0
    %121 = vmatprep.subr.mxu0 0.0
    %122 = vmatpush1.msra.mxu0 0.0
    %123 = vmatprep.subr.mxu0 0.0
    %124 = vmatpush1.msra.mxu0 0.0
    %125 = vmatprep.subr.mxu0 0.0
    %126 = vmatpush1.msra.mxu0 0.0
    %127 = vmatprep.subr.mxu0 0.0
    %128 = vmatpush1.msra.mxu0 0.0
    %129 = vmatprep.subr.mxu0 0.0
    %130 = vmatpush1.msra.mxu0 0.0
    %131 = vmatprep.subr.mxu0 0.0
    %132 = vmatpush1.msra.mxu0 0.0
    %133 = vmatprep.subr.mxu0 0.0
    %134 = vmatpush1.msra.mxu0 0.0
    %135 = vmatprep.mubr.f32.mxu0 0.0
    %136 = vmatmul.mubr.f32.gmra.mrb[0].mxu0 %v54
    %v137 = vpop.f32.mrb[0].mxu0
    %v138 = vadd.f32 0.0, %v137
    %v139 = vpop.f32.mrb[0].mxu0
    %140 = vdwg.mxu0
    %v141 = vadd.f32 %v53, %v138
    %142 = vst [vmem:[#allocation7] sm:$0xff] %v141
    // Predicated region
    $region26: #{tpu_custom_call.1} parent=1 // pred_check
      _
    $region27: #{tpu_custom_call.1} parent=1 // pred_check_branch
      %144 = sbr.rel (0) target = $region29
    $region28: #{tpu_custom_call.1} parent=1 // pred_region
      %s146 = ssub.s32 128, 128
      %147 = vsyncadd [#allocation4], %s146
      %s149 = sshll.u32 [#allocation7], 4
      %s150 = int_to_ptr.vmem [resolvable:$true] %s149
      %152 = dma.vmem_to_hbm [thread:$0]  %s150, 128, %s3, [#allocation4]
    $region29: #{tpu_custom_call.1} parent=1 // pred_fallthru
      _
    // Predicated region
    $region30: #{tpu_custom_call.1} parent=1 // pred_check
      _
    $region31: #{tpu_custom_call.1} parent=1 // pred_check_branch
      %154 = sbr.rel (0) target = $region33
    $region32: #{tpu_custom_call.1} parent=1 // pred_region
      %155 = dma.done [#allocation4], 128
    $region33: #{tpu_custom_call.1} parent=1 // pred_fallthru
      _
    %156 = vsyncpa [#allocation3], 1
    %157 = vsyncpa [#allocation6], 1
    %158 = vsyncpa [#allocation4], 1

</llo_original>
